<compile_context>
chip_gen: v7x
topology: tpu7x:2x2x1
jax: 0.10.0
libtpu: 0.0.40
codegen_flags: <defaults>
</compile_context>

<pallas_src>
import functools

import jax
import jax.numpy as jnp
import numpy as np
from jax.experimental import pallas as pl
from jax.experimental.pallas import tpu as pltpu


def _gemma_rope_kernel(pos_ref, w_ref, cos_ref, sin_ref, *, pack):
    # pos_ref: (Tr, pack)      int32   -- `pack` consecutive flattened positions/row
    # w_ref:   (pack, pack*D)  float32 -- block-diagonal duplicated inv_freq
    # cos/sin: (Tr, pack*D)    x.dtype -- lane-dense view of (B, S, D)
    p = pos_ref[...].astype(jnp.float32)   # int->f32 in-kernel (one VPU op, hidden)
    w = w_ref[...]
    # freqs[r, c] = pos[r*pack + c//D] * inv_freq[(c % D) % (D//2)].
    # Exactly one non-zero term per column -> bit-identical to a plain f32
    # multiply (no MXU precision concerns), all on the VPU.
    freqs = p[:, 0:1] * w[0:1, :]
    for k in range(1, pack):
        freqs = freqs + p[:, k:k + 1] * w[k:k + 1, :]
    # One full-width store per output; cast exactly once.
    cos_ref[...] = jnp.cos(freqs).astype(cos_ref.dtype)
    sin_ref[...] = jnp.sin(freqs).astype(sin_ref.dtype)


def make_inv_freq(dim, base=10000.0):
    # Deterministic "parameter" init, identical to the module's __init__.
    return 1.0 / (base ** (jnp.arange(0, dim, 2, dtype=jnp.float32) / dim))


def gemma_rotary_embedding(x, position_ids, inv_freq, *, max_row_tile=8192,
                           vmem_budget_bytes=24 * 1024 * 1024):
    """Returns (cos, sin) of shape (B, S, dim) with dtype x.dtype."""
    B, S = position_ids.shape
    D2 = inv_freq.shape[-1]
    D = 2 * D2
    N = B * S
    out_dtype = x.dtype
    itemsize = jnp.dtype(out_dtype).itemsize

    # Pack `pack` consecutive positions per 128-lane row (lane-dense layout).
    pack = min(128 // D, 8) if (128 % D == 0) else 1
    while pack > 1 and N % pack:
        pack //= 2
    R = N // pack
    lane_w = pack * D

    # (B, S) -> (R, pack): rows of `pack` consecutive flattened positions.
    # Kept int32; the f32 cast happens inside the kernel.
    pos_rows = position_ids.reshape(R, pack)

    # w[k, c] = inv_freq[(c % D) % D2] if c // D == k else 0.
    inv_f32 = inv_freq.astype(jnp.float32)
    inv_dup = jnp.concatenate([inv_f32, inv_f32])                    # (D,)
    w = (jnp.eye(pack, dtype=jnp.float32)[:, :, None]
         * inv_dup[None, None, :]).reshape(pack, lane_w)

    # ---- Row tile from a VMEM budget (2 pipeline buffers per operand). ------
    # Per buffered row: 2 outputs (lane-padded to a 128 multiple) plus the
    # position tile whose `pack` lanes pad to 128 in VMEM.
    sub = max(8, 32 // itemsize)                  # sublane packing: f32 8, bf16 16
    out_lane_pad = ((lane_w + 127) // 128) * 128
    per_row_bytes = 2 * out_lane_pad * itemsize + 128 * 4
    tile_cap = max(sub, vmem_budget_bytes // (2 * per_row_bytes))
    tile_r = min(R, max_row_tile, tile_cap)
    if tile_r < R:
        # Multiple of the sublane packing -> no masked partial-sublane stores.
        tile_r = max(sub, (tile_r // sub) * sub)
    grid = (pl.cdiv(R, tile_r),)

    cost = pl.CostEstimate(
        flops=2 * N * D * pack,                   # pack muls + (pack-1) adds / elem
        transcendentals=2 * N * D,                # cos + sin over the full width
        bytes_accessed=2 * N * D * itemsize + N * 4,
    )

    vmem = pltpu.MemorySpace.VMEM
    cos_flat, sin_flat = pl.pallas_call(
        functools.partial(_gemma_rope_kernel, pack=pack),
        out_shape=(
            jax.ShapeDtypeStruct((R, lane_w), out_dtype),
            jax.ShapeDtypeStruct((R, lane_w), out_dtype),
        ),
        grid=grid,
        in_specs=[
            pl.BlockSpec((tile_r, pack), lambda i: (i, 0), memory_space=vmem),
            pl.BlockSpec((pack, lane_w), lambda i: (0, 0), memory_space=vmem),
        ],
        out_specs=(
            pl.BlockSpec((tile_r, lane_w), lambda i: (i, 0), memory_space=vmem),
            pl.BlockSpec((tile_r, lane_w), lambda i: (i, 0), memory_space=vmem),
        ),
        compiler_params=pltpu.CompilerParams(
            dimension_semantics=("parallel",),
            vmem_limit_bytes=32 * 1024 * 1024,    # v5e default is 16 MiB; raise it
        ),
        cost_estimate=cost,
    )(pos_rows, w)

    # Row-major (R, pack*D) is byte-identical to (B, S, D): reshape is free.
    return cos_flat.reshape(B, S, D), sin_flat.reshape(B, S, D)


def _reference(x, position_ids, inv_freq):
    # Plain-JAX mirror of the PyTorch forward.
    pos = position_ids.astype(jnp.float32)                           # (B, S)
    freqs = pos[:, :, None] * inv_freq.astype(jnp.float32)[None, None, :]
    emb = jnp.concatenate([freqs, freqs], axis=-1)                   # (B, S, D)
    return jnp.cos(emb).astype(x.dtype), jnp.sin(emb).astype(x.dtype)


if __name__ == "__main__":
    key = jax.random.PRNGKey(0)

    # --- Case 1: module-sized toy shapes, float32 -----------------------------
    dim, max_pos, base = 32, 2048, 10000.0
    B, S = 2, 8
    kx, kp, kp2 = jax.random.split(key, 3)

    x = jax.random.normal(kx, (B, S, dim), dtype=jnp.float32)   # only dtype used
    position_ids = jax.random.randint(kp, (B, S), 0, max_pos, dtype=jnp.int32)
    inv_freq = make_inv_freq(dim, base)

    cos, sin = gemma_rotary_embedding(x, position_ids, inv_freq)
    jax.block_until_ready((cos, sin))

    cos_ref, sin_ref = _reference(x, position_ids, inv_freq)
    np.testing.assert_allclose(np.asarray(cos), np.asarray(cos_ref), atol=1e-5, rtol=1e-5)
    np.testing.assert_allclose(np.asarray(sin), np.asarray(sin_ref), atol=1e-5, rtol=1e-5)
    assert cos.shape == (B, S, dim) and sin.shape == (B, S, dim)
    assert cos.dtype == x.dtype and sin.dtype == x.dtype

    # --- Case 2: larger seq, bfloat16 output (single big VMEM-budgeted tile) --
    dim2, B2, S2 = 64, 2, 2048
    x2 = jnp.zeros((B2, S2, dim2), dtype=jnp.bfloat16)
    position_ids2 = jax.random.randint(kp2, (B2, S2), 0, 2048, dtype=jnp.int32)
    inv_freq2 = make_inv_freq(dim2, base)

    cos2, sin2 = gemma_rotary_embedding(x2, position_ids2, inv_freq2)
    jax.block_until_ready((cos2, sin2))
    cos2_ref, sin2_ref = _reference(x2, position_ids2, inv_freq2)
    np.testing.assert_allclose(np.asarray(cos2.astype(jnp.float32)),
                               np.asarray(cos2_ref.astype(jnp.float32)),
                               atol=1e-2, rtol=1e-2)
    np.testing.assert_allclose(np.asarray(sin2.astype(jnp.float32)),
                               np.asarray(sin2_ref.astype(jnp.float32)),
                               atol=1e-2, rtol=1e-2)
    assert cos2.shape == (B2, S2, dim2) and cos2.dtype == jnp.bfloat16

    # --- Case 3: force a multi-step pipelined grid with a partial tail block --
    cos3, sin3 = gemma_rotary_embedding(x2, position_ids2, inv_freq2,
                                        max_row_tile=120)   # -> tile_r=112, tail=32
    jax.block_until_ready((cos3, sin3))
    np.testing.assert_allclose(np.asarray(cos3.astype(jnp.float32)),
                               np.asarray(cos2_ref.astype(jnp.float32)),
                               atol=1e-2, rtol=1e-2)
    np.testing.assert_allclose(np.asarray(sin3.astype(jnp.float32)),
                               np.asarray(sin2_ref.astype(jnp.float32)),
                               atol=1e-2, rtol=1e-2)

    print("KERNEL_OK")
</pallas_src>

<mosaic_0001>
module attributes {stable_mosaic.version = 11 : i64} {
  func.func @_gemma_rope_kernel(%arg0: i32, %arg1: memref<4x4xi32, #tpu.memory_space<vmem>>, %arg2: memref<4x128xf32, #tpu.memory_space<vmem>>, %arg3: memref<4x128xf32, #tpu.memory_space<vmem>>, %arg4: memref<4x128xf32, #tpu.memory_space<vmem>>) attributes {dimension_semantics = [#tpu.dimension_semantics<parallel>], iteration_bounds = array<i64: 1>, scalar_prefetch = 0 : i64, scratch_operands = 0 : i64, tpu.core_type = #tpu.core_type<tc>, window_params = [{transform_indices = @transform_0, window_bounds = array<i64: 4, 4>}, {pipeline_mode = #tpu.pipeline_mode<synchronous>, transform_indices = @transform_1, window_bounds = array<i64: 4, 128>}, {transform_indices = @transform_2, window_bounds = array<i64: 4, 128>}, {transform_indices = @transform_3, window_bounds = array<i64: 4, 128>}]} {
    %c0 = arith.constant 0 : index
    %c0_0 = arith.constant 0 : index
    %0 = vector.load %arg1[%c0, %c0_0] : memref<4x4xi32, #tpu.memory_space<vmem>>, vector<4x4xi32>
    %1 = arith.sitofp %0 : vector<4x4xi32> to vector<4x4xf32>
    %c0_1 = arith.constant 0 : index
    %c0_2 = arith.constant 0 : index
    %2 = vector.load %arg2[%c0_1, %c0_2] : memref<4x128xf32, #tpu.memory_space<vmem>>, vector<4x128xf32>
    %3 = vector.extract_strided_slice %1 {offsets = [0, 0], sizes = [4, 1], strides = [1, 1]} : vector<4x4xf32> to vector<4x1xf32>
    %4 = vector.extract_strided_slice %2 {offsets = [0, 0], sizes = [1, 128], strides = [1, 1]} : vector<4x128xf32> to vector<1x128xf32>
    %5 = vector.broadcast %3 : vector<4x1xf32> to vector<4x128xf32>
    %6 = vector.broadcast %4 : vector<1x128xf32> to vector<4x128xf32>
    %7 = arith.mulf %5, %6 : vector<4x128xf32>
    %8 = vector.extract_strided_slice %1 {offsets = [0, 1], sizes = [4, 1], strides = [1, 1]} : vector<4x4xf32> to vector<4x1xf32>
    %9 = vector.extract_strided_slice %2 {offsets = [1, 0], sizes = [1, 128], strides = [1, 1]} : vector<4x128xf32> to vector<1x128xf32>
    %10 = vector.broadcast %8 : vector<4x1xf32> to vector<4x128xf32>
    %11 = vector.broadcast %9 : vector<1x128xf32> to vector<4x128xf32>
    %12 = arith.mulf %10, %11 : vector<4x128xf32>
    %13 = arith.addf %7, %12 : vector<4x128xf32>
    %14 = vector.extract_strided_slice %1 {offsets = [0, 2], sizes = [4, 1], strides = [1, 1]} : vector<4x4xf32> to vector<4x1xf32>
    %15 = vector.extract_strided_slice %2 {offsets = [2, 0], sizes = [1, 128], strides = [1, 1]} : vector<4x128xf32> to vector<1x128xf32>
    %16 = vector.broadcast %14 : vector<4x1xf32> to vector<4x128xf32>
    %17 = vector.broadcast %15 : vector<1x128xf32> to vector<4x128xf32>
    %18 = arith.mulf %16, %17 : vector<4x128xf32>
    %19 = arith.addf %13, %18 : vector<4x128xf32>
    %20 = vector.extract_strided_slice %1 {offsets = [0, 3], sizes = [4, 1], strides = [1, 1]} : vector<4x4xf32> to vector<4x1xf32>
    %21 = vector.extract_strided_slice %2 {offsets = [3, 0], sizes = [1, 128], strides = [1, 1]} : vector<4x128xf32> to vector<1x128xf32>
    %22 = vector.broadcast %20 : vector<4x1xf32> to vector<4x128xf32>
    %23 = vector.broadcast %21 : vector<1x128xf32> to vector<4x128xf32>
    %24 = arith.mulf %22, %23 : vector<4x128xf32>
    %25 = arith.addf %19, %24 : vector<4x128xf32>
    %26 = math.cos %25 : vector<4x128xf32>
    %c0_3 = arith.constant 0 : index
    %c0_4 = arith.constant 0 : index
    %27 = vector.load %arg3[%c0_3, %c0_4] : memref<4x128xf32, #tpu.memory_space<vmem>>, vector<4x128xf32>
    tpu.vector_store %arg3[%c0_3, %c0_4], %26 {strides = array<i32>} : memref<4x128xf32, #tpu.memory_space<vmem>>, vector<4x128xf32>,
    %28 = math.sin %25 : vector<4x128xf32>
    %c0_5 = arith.constant 0 : index
    %c0_6 = arith.constant 0 : index
    %29 = vector.load %arg4[%c0_5, %c0_6] : memref<4x128xf32, #tpu.memory_space<vmem>>, vector<4x128xf32>
    tpu.vector_store %arg4[%c0_5, %c0_6], %28 {strides = array<i32>} : memref<4x128xf32, #tpu.memory_space<vmem>>, vector<4x128xf32>,
    return
  }
  func.func @transform_0(%arg0: i32) -> (i32, i32) {
    %c0_i32 = arith.constant 0 : i32
    %c0_i32_0 = arith.constant 0 : i32
    return %arg0, %c0_i32 : i32, i32
  }
  func.func @transform_1(%arg0: i32) -> (i32, i32) {
    %c0_i32 = arith.constant 0 : i32
    %c0_i32_0 = arith.constant 0 : i32
    %c0_i32_1 = arith.constant 0 : i32
    return %c0_i32, %c0_i32_0 : i32, i32
  }
  func.func @transform_2(%arg0: i32) -> (i32, i32) {
    %c0_i32 = arith.constant 0 : i32
    %c0_i32_0 = arith.constant 0 : i32
    return %arg0, %c0_i32 : i32, i32
  }
  func.func @transform_3(%arg0: i32) -> (i32, i32) {
    %c0_i32 = arith.constant 0 : i32
    %c0_i32_0 = arith.constant 0 : i32
    return %arg0, %c0_i32 : i32, i32
  }
}

</mosaic_0001>

<llo_original>
// kernel: tpu_custom_call.1
$region0: #{tpu_custom_call.1}
  #allocation0 [shape = 'u32[]', space=smem, size = 0x4, offset = 0x4, fixed_abs, tag = 'smem constant byte address 0x4 - core index']
  #allocation1 [shape = 'u32[144,128]{1,0:T(1,128)}', space=vmem, size = 0x12000, scoped, tag = 'internal scratch']
  %s0 = inlined_call_operand.hbm [shape: s32[4,4], index: 0, kind: input, shape index: {}]
  %s1 = inlined_call_operand.hbm [shape: f32[4,128], index: 1, kind: input, shape index: {}]
  %s2 = inlined_call_operand.hbm [shape: f32[4,128], index: 2, kind: output, shape index: {0}]
  %s3 = inlined_call_operand.hbm [shape: f32[4,128], index: 3, kind: output, shape index: {1}]
  %4 = xla_tuple %s2, %s3
  %s5 = sld [smem:[#allocation0]]
  $region34: #{tpu_custom_call.1} parent=0
    _
  %s7 = ssub.s32 1, %s5
  %s8 = scalar_select 0, %s7, %s5
  $region1: #{tpu_custom_call.1} parent=0
    #allocation2 [shape = 'u8[2048]{0}', space=vmem, size = 0x800, scoped, tag = 'input window, operand 0, single buffered']
    #allocation3 [shape = 's32[1]{0}', space=sflag, size = 0x4, scoped, tag = 'scoped memory for tpu_custom_call.1']
    #allocation4 [shape = 's32[1]{0}', space=sflag, size = 0x4, scoped, tag = 'scoped memory for tpu_custom_call.1']
    #allocation5 [shape = 'u8[2048]{0}', space=vmem, size = 0x800, scoped, tag = 'input window, operand 1, single buffered']
    #allocation6 [shape = 's32[1]{0}', space=sflag, size = 0x4, scoped, tag = 'scoped memory for tpu_custom_call.1']
    #allocation7 [shape = 'u8[2048]{0}', space=vmem, size = 0x800, scoped, tag = 'output window, operand 0, single buffered']
    #allocation8 [shape = 'u8[2048]{0}', space=vmem, size = 0x800, scoped, tag = 'output window, operand 1, single buffered']
    #allocation9 [shape = 's32[1]{0}', space=sflag, size = 0x4, scoped, tag = 'scoped memory for tpu_custom_call.1']
    %9 = vsyncpa [#allocation3], 0
    %10 = vsyncpa [#allocation6], 0
    %11 = vsyncpa [#allocation4], 0
    %12 = vsyncpa [#allocation9], 0
    // Predicated region
    $region2: #{tpu_custom_call.1} parent=1 // pred_check
      _
    $region3: #{tpu_custom_call.1} parent=1 // pred_check_branch
      %14 = sbr.rel (0) target = $region5
    $region4: #{tpu_custom_call.1} parent=1 // pred_region
      %s16 = ssub.s32 64, 64
      %17 = vsyncadd [#allocation3], %s16
      %s19 = sshll.u32 [#allocation2], 4
      %s20 = int_to_ptr.vmem [resolvable:$true] %s19
      %22 = dma.hbm_to_vmem [thread:$0]  %s0, 64, %s20, [#allocation3]
    $region5: #{tpu_custom_call.1} parent=1 // pred_fallthru
      _
    // Predicated region
    $region6: #{tpu_custom_call.1} parent=1 // pred_check
      _
    $region7: #{tpu_custom_call.1} parent=1 // pred_check_branch
      %24 = sbr.rel (0) target = $region9
    $region8: #{tpu_custom_call.1} parent=1 // pred_region
      %s26 = ssub.s32 64, 64
      %27 = vsyncadd [#allocation6], %s26
      %s29 = sshll.u32 [#allocation5], 4
      %s30 = int_to_ptr.vmem [resolvable:$true] %s29
      %32 = dma.hbm_to_vmem [thread:$0]  %s1, 64, %s30, [#allocation6]
    $region9: #{tpu_custom_call.1} parent=1 // pred_fallthru
      _
    // Predicated region
    $region10: #{tpu_custom_call.1} parent=1 // pred_check
      _
    $region11: #{tpu_custom_call.1} parent=1 // pred_check_branch
      %34 = sbr.rel (0) target = $region13
    $region12: #{tpu_custom_call.1} parent=1 // pred_region
      %35 = dma.done [#allocation3], 64
    $region13: #{tpu_custom_call.1} parent=1 // pred_fallthru
      _
    // Predicated region
    $region14: #{tpu_custom_call.1} parent=1 // pred_check
      _
    $region15: #{tpu_custom_call.1} parent=1 // pred_check_branch
      %37 = sbr.rel (0) target = $region17
    $region16: #{tpu_custom_call.1} parent=1 // pred_region
      %38 = dma.done [#allocation6], 64
    $region17: #{tpu_custom_call.1} parent=1 // pred_fallthru
      _
    %v39 = vld [vmem:[#allocation2] sm:$0xf]
    %v40 = vcvt.s32.f32 %v39
    %v41 = vld [vmem:[#allocation5] sm:$0xf]
    %43 = vset.pattern.permute.xlu0 0
    %44 = vperm.xlu0 %43, %v40
    %v45 = vpop.permute.xlu0 %44
    %v47 = vlaneseq
    %v48 = vshrl.u32 %v47, 7
    %v49 = vsub.s32 0, %v48
    %v50 = vrot.slane %v41, %v49
    %v51 = vmul.f32 %v45, %v50
    %52 = vset.pattern.permute.xlu0 1
    %53 = vperm.xlu0 %52, %v40
    %v54 = vpop.permute.xlu0 %53
    %v56 = vlaneseq
    %v57 = vshrl.u32 %v56, 7
    %v58 = vsub.s32 1, %v57
    %v59 = vrot.slane %v41, %v58
    %v60 = vmul.f32 %v54, %v59
    %v61 = vadd.f32 %v51, %v60
    %62 = vset.pattern.permute.xlu0 2
    %63 = vperm.xlu0 %62, %v40
    %v64 = vpop.permute.xlu0 %63
    %v66 = vlaneseq
    %v67 = vshrl.u32 %v66, 7
    %v68 = vsub.s32 2, %v67
    %v69 = vrot.slane %v41, %v68
    %v70 = vmul.f32 %v64, %v69
    %v71 = vadd.f32 %v61, %v70
    %72 = vset.pattern.permute.xlu0 3
    %73 = vperm.xlu0 %72, %v40
    %v74 = vpop.permute.xlu0 %73
    %v76 = vlaneseq
    %v77 = vshrl.u32 %v76, 7
    %v78 = vsub.s32 3, %v77
    %v79 = vrot.slane %v41, %v78
    %v80 = vmul.f32 %v74, %v79
    %v81 = vadd.f32 %v71, %v80
    %v82 = vand.u32 2147483647, %v81
    %vm83 = vcmp.le.f32.partialorder %v82, 0.7853982
    %vm84 = vcmp.lt.s32.totalorder %v81, 0
    %v85 = vand.u32 %v81, 2139095040
    %v86 = vshrl.u32 %v85, 23
    %v87 = vsub.s32 %v86, 127
    %v88 = vand.u32 2147483647, %v81
    %v89 = vand.u32 %v88, 8388607
    %v90 = vor.u32 %v89, 8388608
    %v91 = vsub.s32 0, %v90
    %v92 = vadd.s32 %v87, 1
    %vm93 = vcmp.gt.s32.totalorder %v92, 0
    %v94 = vsel %vm93, %v92, 0
    %v95 = vshrl.u32 %v94, 5
    %v96 = vand.u32 %v94, 31
    %v97 = vsub.s32 32, %v96
    %v98 = vshrl.u32 683565275, %v97
    %v99 = vshll.u32 683565275, %v96
    %v100 = vshrl.u32 2475754826, %v97
    %v101 = vor.u32 %v99, %v100
    %v102 = vshll.u32 2475754826, %v96
    %v103 = vshrl.u32 2131351028, %v97
    %v104 = vor.u32 %v102, %v103
    %v105 = vshll.u32 2131351028, %v96
    %v106 = vshrl.u32 2102212464, %v97
    %v107 = vor.u32 %v105, %v106
    %v108 = vshll.u32 2102212464, %v96
    %v109 = vshrl.u32 920167782, %v97
    %v110 = vor.u32 %v108, %v109
    %v111 = vshll.u32 920167782, %v96
    %v112 = vshrl.u32 1326507024, %v97
    %v113 = vor.u32 %v111, %v112
    %vm114 = vcmp.lt.s32.totalorder %v95, 1
    %vm115 = vcmp.lt.s32.totalorder %v95, 2
    %vm116 = vcmp.lt.s32.totalorder %v95, 3
    %vm117 = vcmp.lt.s32.totalorder %v95, 4
    %v118 = vsel %vm114, %v98, %v101
    %v119 = vsel %vm117, %v107, 2102212464
    %v120 = vsel %vm116, %v104, %v119
    %v121 = vsel %vm115, %v118, %v120
    %v122 = vsel %vm114, %v101, %v104
    %v123 = vsel %vm117, %v110, 920167782
    %v124 = vsel %vm116, %v107, %v123
    %v125 = vsel %vm115, %v122, %v124
    %v126 = vsel %vm114, %v104, %v107
    %v127 = vsel %vm117, %v113, 1326507024
    %v128 = vsel %vm116, %v110, %v127
    %v129 = vsel %vm115, %v126, %v128
    %v130 = vshll.u32 %v90, 8
    %v131 = vmul.u32.u64.compose %v130, %v129
    %v132 = vextract.low.u32 %v131
    %v133 = vextract.high.u32 %v131
    %v134 = vmul.u32.u64.compose %v130, %v125
    %v135 = vextract.low.u32 %v134
    %v136 = vextract.high.u32 %v134
    %v137 = vmul.u32 %v130, %v121
    %v138 = vadd.s32 %v133, %v135
    %vm139 = vc.u32 %v133, %v135
    %v140 = vadd.s32 %v136, 1
    %v141 = vsel %vm139, %v140, %v136
    %v142 = vadd.s32 %v137, %v141
    %v143 = vadd.s32 %v142, 536870912
    %v144 = vshrl.u32 %v143, 30
    %v145 = vshll.u32 %v144, 30
    %v146 = vsub.s32 %v142, %v145
    %vm147 = vcmp.lt.s32.totalorder %v146, 0
    %v148 = vsub.s32 0, %v146
    %v149 = vsel %vm147, %v148, %v146
    %v150 = vclz %v149
    %v151 = vsub.s32 %v150, 2
    %vm152 = vcmp.gt.s32.totalorder 0, %v151
    %v153 = vsel %vm152, 0, %v151
    %v154 = vsub.s32 32, %v153
    %v155 = vshll.u32 %v146, %v153
    %v156 = vshrl.u32 %v138, %v154
    %v157 = vor.u32 %v155, %v156
    %v158 = vsub.s32 4294967266, %v153
    %v159 = vadd.s32 %v158, 127
    %v160 = vshll.u32 %v159, 23
    %v161 = vor.u32 4788187, %v160
    %v162 = vand.u32 2147483647, %v161
    %v164 = vcvt.s32.f32 %v157
    %v165 = vmul.f32 %v164, %v162
    %v166 = vxor.u32 %v165, 2147483648
    %v167 = vsel %vm84, %v166, %v165
    %v168 = vsub.s32 4, %v144
    %v169 = vsel %vm84, %v168, %v144
    %v170 = vsel %vm83, %v81, %v167
    %v171 = vsel %vm83, 0, %v169
    %v172 = vcosq.f32.pop %v170
    %v173 = vsinq.f32.pop %v170
    %vm174 = vweird.f32 %v81
    %v175 = vand.u32 %v171, 3
    %vm176 = vcmp.lt.s32.totalorder %v175, 2
    %vm177 = vcmp.eq.s32.totalorder %v175, 0
    %v178 = vxor.u32 %v173, 2147483648
    %v179 = vsel %vm177, %v172, %v178
    %vm180 = vcmp.eq.s32.totalorder %v175, 2
    %v181 = vxor.u32 %v172, 2147483648
    %v182 = vsel %vm180, %v181, %v173
    %v183 = vsel %vm176, %v179, %v182
    %v184 = vsel %vm174, nan, %v183
    %185 = vst [vmem:[#allocation7] sm:$0xf] %v184
    %v186 = vand.u32 2147483647, %v81
    %vm187 = vcmp.le.f32.partialorder %v186, 0.7853982
    %vm188 = vcmp.lt.s32.totalorder %v81, 0
    %v189 = vand.u32 %v81, 2139095040
    %v190 = vshrl.u32 %v189, 23
    %v191 = vsub.s32 %v190, 127
    %v192 = vand.u32 2147483647, %v81
    %v193 = vand.u32 %v192, 8388607
    %v194 = vor.u32 %v193, 8388608
    %v195 = vsub.s32 0, %v194
    %v196 = vadd.s32 %v191, 1
    %vm197 = vcmp.gt.s32.totalorder %v196, 0
    %v198 = vsel %vm197, %v196, 0
    %v199 = vshrl.u32 %v198, 5
    %v200 = vand.u32 %v198, 31
    %v201 = vsub.s32 32, %v200
    %v202 = vshrl.u32 683565275, %v201
    %v203 = vshll.u32 683565275, %v200
    %v204 = vshrl.u32 2475754826, %v201
    %v205 = vor.u32 %v203, %v204
    %v206 = vshll.u32 2475754826, %v200
    %v207 = vshrl.u32 2131351028, %v201
    %v208 = vor.u32 %v206, %v207
    %v209 = vshll.u32 2131351028, %v200
    %v210 = vshrl.u32 2102212464, %v201
    %v211 = vor.u32 %v209, %v210
    %v212 = vshll.u32 2102212464, %v200
    %v213 = vshrl.u32 920167782, %v201
    %v214 = vor.u32 %v212, %v213
    %v215 = vshll.u32 920167782, %v200
    %v216 = vshrl.u32 1326507024, %v201
    %v217 = vor.u32 %v215, %v216
    %vm218 = vcmp.lt.s32.totalorder %v199, 1
    %vm219 = vcmp.lt.s32.totalorder %v199, 2
    %vm220 = vcmp.lt.s32.totalorder %v199, 3
    %vm221 = vcmp.lt.s32.totalorder %v199, 4
    %v222 = vsel %vm218, %v202, %v205
    %v223 = vsel %vm221, %v211, 2102212464
    %v224 = vsel %vm220, %v208, %v223
    %v225 = vsel %vm219, %v222, %v224
    %v226 = vsel %vm218, %v205, %v208
    %v227 = vsel %vm221, %v214, 920167782
    %v228 = vsel %vm220, %v211, %v227
    %v229 = vsel %vm219, %v226, %v228
    %v230 = vsel %vm218, %v208, %v211
    %v231 = vsel %vm221, %v217, 1326507024
    %v232 = vsel %vm220, %v214, %v231
    %v233 = vsel %vm219, %v230, %v232
    %v234 = vshll.u32 %v194, 8
    %v235 = vmul.u32.u64.compose %v234, %v233
    %v236 = vextract.low.u32 %v235
    %v237 = vextract.high.u32 %v235
    %v238 = vmul.u32.u64.compose %v234, %v229
    %v239 = vextract.low.u32 %v238
    %v240 = vextract.high.u32 %v238
    %v241 = vmul.u32 %v234, %v225
    %v242 = vadd.s32 %v237, %v239
    %vm243 = vc.u32 %v237, %v239
    %v244 = vadd.s32 %v240, 1
    %v245 = vsel %vm243, %v244, %v240
    %v246 = vadd.s32 %v241, %v245
    %v247 = vadd.s32 %v246, 536870912
    %v248 = vshrl.u32 %v247, 30
    %v249 = vshll.u32 %v248, 30
    %v250 = vsub.s32 %v246, %v249
    %vm251 = vcmp.lt.s32.totalorder %v250, 0
    %v252 = vsub.s32 0, %v250
    %v253 = vsel %vm251, %v252, %v250
    %v254 = vclz %v253
    %v255 = vsub.s32 %v254, 2
    %vm256 = vcmp.gt.s32.totalorder 0, %v255
    %v257 = vsel %vm256, 0, %v255
    %v258 = vsub.s32 32, %v257
    %v259 = vshll.u32 %v250, %v257
    %v260 = vshrl.u32 %v242, %v258
    %v261 = vor.u32 %v259, %v260
    %v262 = vsub.s32 4294967266, %v257
    %v263 = vadd.s32 %v262, 127
    %v264 = vshll.u32 %v263, 23
    %v265 = vor.u32 4788187, %v264
    %v266 = vand.u32 2147483647, %v265
    %v268 = vcvt.s32.f32 %v261
    %v269 = vmul.f32 %v268, %v266
    %v270 = vxor.u32 %v269, 2147483648
    %v271 = vsel %vm188, %v270, %v269
    %v272 = vsub.s32 4, %v248
    %v273 = vsel %vm188, %v272, %v248
    %v274 = vsel %vm187, %v81, %v271
    %v275 = vsel %vm187, 0, %v273
    %v276 = vcosq.f32.pop %v274
    %v277 = vsinq.f32.pop %v274
    %vm278 = vweird.f32 %v81
    %v279 = vadd.s32 %v275, 3
    %v280 = vand.u32 %v279, 3
    %vm281 = vcmp.lt.s32.totalorder %v280, 2
    %vm282 = vcmp.eq.s32.totalorder %v280, 0
    %v283 = vxor.u32 %v277, 2147483648
    %v284 = vsel %vm282, %v276, %v283
    %vm285 = vcmp.eq.s32.totalorder %v280, 2
    %v286 = vxor.u32 %v276, 2147483648
    %v287 = vsel %vm285, %v286, %v277
    %v288 = vsel %vm281, %v284, %v287
    %v289 = vsel %vm278, nan, %v288
    %290 = vst [vmem:[#allocation8] sm:$0xf] %v289
    // Predicated region
    $region18: #{tpu_custom_call.1} parent=1 // pred_check
      _
    $region19: #{tpu_custom_call.1} parent=1 // pred_check_branch
      %292 = sbr.rel (0) target = $region21
    $region20: #{tpu_custom_call.1} parent=1 // pred_region
      %s294 = ssub.s32 64, 64
      %295 = vsyncadd [#allocation4], %s294
      %s297 = sshll.u32 [#allocation7], 4
      %s298 = int_to_ptr.vmem [resolvable:$true] %s297
      %300 = dma.vmem_to_hbm [thread:$0]  %s298, 64, %s2, [#allocation4]
    $region21: #{tpu_custom_call.1} parent=1 // pred_fallthru
      _
    // Predicated region
    $region22: #{tpu_custom_call.1} parent=1 // pred_check
      _
    $region23: #{tpu_custom_call.1} parent=1 // pred_check_branch
      %302 = sbr.rel (0) target = $region25
    $region24: #{tpu_custom_call.1} parent=1 // pred_region
      %s304 = ssub.s32 64, 64
      %305 = vsyncadd [#allocation9], %s304
      %s307 = sshll.u32 [#allocation8], 4
      %s308 = int_to_ptr.vmem [resolvable:$true] %s307
      %310 = dma.vmem_to_hbm [thread:$0]  %s308, 64, %s3, [#allocation9]
    $region25: #{tpu_custom_call.1} parent=1 // pred_fallthru
      _
    // Predicated region
    $region26: #{tpu_custom_call.1} parent=1 // pred_check
      _
    $region27: #{tpu_custom_call.1} parent=1 // pred_check_branch
      %312 = sbr.rel (0) target = $region29
    $region28: #{tpu_custom_call.1} parent=1 // pred_region
      %313 = dma.done [#allocation4], 64
    $region29: #{tpu_custom_call.1} parent=1 // pred_fallthru
      _
    // Predicated region
    $region30: #{tpu_custom_call.1} parent=1 // pred_check
      _
    $region31: #{tpu_custom_call.1} parent=1 // pred_check_branch
      %315 = sbr.rel (0) target = $region33
    $region32: #{tpu_custom_call.1} parent=1 // pred_region
      %316 = dma.done [#allocation9], 64
    $region33: #{tpu_custom_call.1} parent=1 // pred_fallthru
      _
    %317 = vsyncpa [#allocation3], 1
    %318 = vsyncpa [#allocation6], 1
    %319 = vsyncpa [#allocation4], 1
    %320 = vsyncpa [#allocation9], 1

</llo_original>
